<compile_context>
chip_gen: v5e
topology: v5e:2x2
jax: 0.10.0
libtpu: 0.0.40
codegen_flags: <defaults>
</compile_context>

<pallas_src>
import jax
import jax.numpy as jnp
from jax.experimental import pallas as pl
from jax.experimental.pallas import tpu as pltpu


# ------------------------------- Pallas kernel -------------------------------

def _frozen_bn_kernel(x_ref, scale_ref, shift_ref, o_ref):
    # x_ref / o_ref : (Cblk, Sblk) in x.dtype (batch dim squeezed out)
    # scale / shift : (Cblk, 1) f32 — broadcast across lanes stays implicit
    x = x_ref[...].astype(jnp.float32)
    o_ref[...] = (x * scale_ref[...] + shift_ref[...]).astype(o_ref.dtype)


# ------------------------------ tiling heuristics -----------------------------

def _largest_aligned_divisor(n, align, limit):
    """Largest multiple of `align` that divides n and is <= limit, else None."""
    best = None
    d = 1
    while d * d <= n:
        if n % d == 0:
            for cand in (d, n // d):
                if cand % align == 0 and cand <= limit and (best is None or cand > best):
                    best = cand
        d += 1
    return best


def _tile_plan(c, hw, itemsize):
    """Pick (cblk, sblk, sub_align, vmem_limit) in a generation-aware way."""
    try:
        vmem_cap = int(pltpu.get_tpu_info().vmem_capacity_bytes)
    except Exception:
        vmem_cap = 128 << 20
    small_vmem = vmem_cap < (100 << 20)                 # v7x class: 64 MiB / TC
    tile_byte_target = (4 << 20) if small_vmem else (8 << 20)
    scoped_cap = (40 << 20) if small_vmem else (96 << 20)

    sub_align = 8 * max(1, 4 // itemsize)               # f32:8  bf16/f16:16  int8:32
    elem_budget = max(sub_align * 128, tile_byte_target // itemsize)

    # Spatial (lane) dim first: full extent if it fits, else a 128-multiple that
    # divides hw (unmasked stores), else a ragged 128-aligned fallback.
    min_rows = min(c, sub_align)
    if hw * min_rows <= elem_budget:
        sblk = hw
    else:
        lane_limit = max(128, elem_budget // min_rows)
        sblk = _largest_aligned_divisor(hw, 128, lane_limit)
        if sblk is None:
            sblk = max(128, (lane_limit // 128) * 128)

    # Channel (sublane) dim: fill the remaining element budget.
    row_limit = max(1, elem_budget // sblk)
    if c <= row_limit:
        cblk = c
    elif row_limit < sub_align:
        cblk = sub_align
    else:
        cblk = _largest_aligned_divisor(c, sub_align, row_limit)
        if cblk is None:
            cblk = (row_limit // sub_align) * sub_align

    # Double-buffered in + out data tiles, plus params/margin.
    tile_bytes = cblk * sblk * itemsize
    vmem_limit = int(min(scoped_cap, max(16 << 20, 4 * tile_bytes + (4 << 20))))
    return cblk, sblk, sub_align, vmem_limit


# --------------------------------- wrapper -----------------------------------

def frozen_batch_norm_2d(x, weight, bias, running_mean, running_var, *, eps=1e-5):
    """FrozenBatchNorm2d forward. x: (B, C, H, W); params: (C,). Preserves x.dtype."""
    b, c, h, w = x.shape
    hw = h * w
    itemsize = jnp.dtype(x.dtype).itemsize

    # Per-channel scale/shift: C-length f32 ops — negligible next to the
    # HBM-bound streaming kernel; keeps the kernel at 2 tiny param streams.
    f32 = jnp.float32
    scale = weight.astype(f32) * jax.lax.rsqrt(running_var.astype(f32) + eps)
    shift = bias.astype(f32) - running_mean.astype(f32) * scale
    scale2 = scale.reshape(c, 1)
    shift2 = shift.reshape(c, 1)

    x3 = x.reshape(b, c, hw)                            # contiguity-preserving view

    cblk, sblk, sub_align, vmem_limit = _tile_plan(c, hw, itemsize)
    grid = [b, pl.cdiv(c, cblk), pl.cdiv(hw, sblk)]

    # Guarantee >= 2 grid steps when a clean split exists (v7x megacore sharding;
    # one extra ~0.35 us step is noise on single-TC chips).
    if grid[0] * grid[1] * grid[2] == 1:
        if sblk == hw and hw % 256 == 0:
            sblk = hw // 2
            grid[2] = 2
        elif cblk == c and c % (2 * sub_align) == 0:
            cblk = c // 2
            grid[1] = 2
    grid = tuple(grid)

    data_spec = pl.BlockSpec((None, cblk, sblk), lambda bi, ci, si: (bi, ci, si))
    param_spec = pl.BlockSpec((cblk, 1), lambda bi, ci, si: (ci, 0))

    out = pl.pallas_call(
        _frozen_bn_kernel,
        out_shape=jax.ShapeDtypeStruct((b, c, hw), x.dtype),
        grid=grid,
        in_specs=[data_spec, param_spec, param_spec],
        out_specs=data_spec,
        compiler_params=pltpu.CompilerParams(
            dimension_semantics=("parallel", "parallel", "parallel"),
            vmem_limit_bytes=vmem_limit,
        ),
    )(x3, scale2, shift2)

    return out.reshape(b, c, h, w)


# ----------------------------------- main ------------------------------------

if __name__ == "__main__":
    key = jax.random.PRNGKey(0)
    kx, kw, kb, km, kv = jax.random.split(key, 5)

    # Small, TPU-friendly shapes (multi-step grid along batch).
    bsz, ch, hgt, wid = 2, 16, 32, 32
    x = jax.random.normal(kx, (bsz, ch, hgt, wid), jnp.float32)
    weight = 1.0 + 0.1 * jax.random.normal(kw, (ch,), jnp.float32)
    bias = 0.1 * jax.random.normal(kb, (ch,), jnp.float32)
    running_mean = 0.1 * jax.random.normal(km, (ch,), jnp.float32)
    running_var = jax.nn.softplus(jax.random.normal(kv, (ch,), jnp.float32)) + 0.5

    fwd = jax.jit(frozen_batch_norm_2d)

    # f32 path.
    y = fwd(x, weight, bias, running_mean, running_var)
    jax.block_until_ready(y)

    # Pure-JAX reference (mirrors the PyTorch forward exactly).
    scale_ref = weight * jax.lax.rsqrt(running_var + 1e-5)
    shift_ref = bias - running_mean * scale_ref
    y_ref = x * scale_ref[None, :, None, None] + shift_ref[None, :, None, None]

    assert y.shape == x.shape and y.dtype == x.dtype, (y.shape, y.dtype)
    assert bool(jnp.isfinite(y).all())
    max_err = float(jnp.max(jnp.abs(y - y_ref)))
    assert bool(jnp.allclose(y, y_ref, atol=1e-5, rtol=1e-5)), max_err

    # bf16 path: dtype must be preserved (native-dtype HBM I/O, f32 math inside).
    xb = x.astype(jnp.bfloat16)
    yb = fwd(xb, weight, bias, running_mean, running_var)
    jax.block_until_ready(yb)
    assert yb.dtype == jnp.bfloat16, yb.dtype
    assert bool(jnp.allclose(yb.astype(jnp.float32), y_ref, atol=5e-2, rtol=5e-2))

    print("KERNEL_OK")
</pallas_src>

<mosaic_0001>
module attributes {stable_mosaic.version = 11 : i64} {
  func.func @_frozen_bn_kernel(%arg0: i32, %arg1: i32, %arg2: i32, %arg3: memref<1x16x1024xf32, #tpu.memory_space<vmem>>, %arg4: memref<16x1xf32, #tpu.memory_space<vmem>>, %arg5: memref<16x1xf32, #tpu.memory_space<vmem>>, %arg6: memref<1x16x1024xf32, #tpu.memory_space<vmem>>) attributes {dimension_semantics = [#tpu.dimension_semantics<parallel>, #tpu.dimension_semantics<parallel>, #tpu.dimension_semantics<parallel>], iteration_bounds = array<i64: 2, 1, 1>, scalar_prefetch = 0 : i64, scratch_operands = 0 : i64, tpu.core_type = #tpu.core_type<tc>, window_params = [{transform_indices = @transform_0, window_bounds = array<i64: 1, 16, 1024>}, {transform_indices = @transform_1, window_bounds = array<i64: 16, 1>}, {transform_indices = @transform_2, window_bounds = array<i64: 16, 1>}, {transform_indices = @transform_3, window_bounds = array<i64: 1, 16, 1024>}]} {
    %c0 = arith.constant 0 : index
    %c0_0 = arith.constant 0 : index
    %c0_1 = arith.constant 0 : index
    %0 = vector.load %arg3[%c0, %c0_0, %c0_1] : memref<1x16x1024xf32, #tpu.memory_space<vmem>>, vector<1x16x1024xf32>
    %1 = vector.shape_cast %0 : vector<1x16x1024xf32> to vector<16x1024xf32>
    %c0_2 = arith.constant 0 : index
    %c0_3 = arith.constant 0 : index
    %2 = vector.load %arg4[%c0_2, %c0_3] : memref<16x1xf32, #tpu.memory_space<vmem>>, vector<16x1xf32>
    %3 = vector.broadcast %2 : vector<16x1xf32> to vector<16x1024xf32>
    %4 = arith.mulf %1, %3 : vector<16x1024xf32>
    %c0_4 = arith.constant 0 : index
    %c0_5 = arith.constant 0 : index
    %5 = vector.load %arg5[%c0_4, %c0_5] : memref<16x1xf32, #tpu.memory_space<vmem>>, vector<16x1xf32>
    %6 = vector.broadcast %5 : vector<16x1xf32> to vector<16x1024xf32>
    %7 = arith.addf %4, %6 : vector<16x1024xf32>
    %c0_6 = arith.constant 0 : index
    %c0_7 = arith.constant 0 : index
    %c0_8 = arith.constant 0 : index
    %8 = vector.load %arg6[%c0_6, %c0_7, %c0_8] : memref<1x16x1024xf32, #tpu.memory_space<vmem>>, vector<1x16x1024xf32>
    %9 = vector.shape_cast %8 : vector<1x16x1024xf32> to vector<16x1024xf32>
    %10 = vector.shape_cast %7 : vector<16x1024xf32> to vector<1x16x1024xf32>
    tpu.vector_store %arg6[%c0_6, %c0_7, %c0_8], %10 {strides = array<i32>} : memref<1x16x1024xf32, #tpu.memory_space<vmem>>, vector<1x16x1024xf32>,
    return
  }
  func.func @transform_0(%arg0: i32, %arg1: i32, %arg2: i32) -> (i32, i32, i32) {
    %c0_i32 = arith.constant 0 : i32
    return %arg0, %arg1, %arg2 : i32, i32, i32
  }
  func.func @transform_1(%arg0: i32, %arg1: i32, %arg2: i32) -> (i32, i32) {
    %c0_i32 = arith.constant 0 : i32
    %c0_i32_0 = arith.constant 0 : i32
    return %arg1, %c0_i32 : i32, i32
  }
  func.func @transform_2(%arg0: i32, %arg1: i32, %arg2: i32) -> (i32, i32) {
    %c0_i32 = arith.constant 0 : i32
    %c0_i32_0 = arith.constant 0 : i32
    return %arg1, %c0_i32 : i32, i32
  }
  func.func @transform_3(%arg0: i32, %arg1: i32, %arg2: i32) -> (i32, i32, i32) {
    %c0_i32 = arith.constant 0 : i32
    return %arg0, %arg1, %arg2 : i32, i32, i32
  }
}

</mosaic_0001>

<llo_original>
// kernel: frozen_batch_norm_2d.1
$region0: #{frozen_batch_norm_2d.1}
  #allocation0 [shape = 'u32[]', space=smem, size = 0x4, offset = 0x4, fixed_abs, tag = 'smem constant byte address 0x4 - core index']
  #allocation1 [shape = 'u32[72,128]{1,0:T(1,128)}', space=vmem, size = 0x9000, scoped, tag = 'internal scratch']
  %s0 = inlined_call_operand.vmem [shape: f32[2,16,1024], index: 0, kind: input, shape index: {}]
  %s1 = inlined_call_operand.vmem [shape: f32[16,1], index: 1, kind: input, shape index: {}]
  %s2 = inlined_call_operand.vmem [shape: f32[16,1], index: 2, kind: input, shape index: {}]
  %s3 = inlined_call_operand.vmem [shape: f32[2,16,1024], index: 3, kind: output, shape index: {}]
  %s4 = sld [smem:[#allocation0]]
  $region45: #{frozen_batch_norm_2d.1} parent=0
    _
  %s6 = ssub.s32 1, %s4
  %s7 = scalar_select 0, %s6, %s4
  loop: start=0, step=1, limit=4
  $region2: #{frozen_batch_norm_2d.1} parent=0 // loop_pre_header
    _
  $region3: #{frozen_batch_norm_2d.1} parent=0 // loop_header
    %s9 = sphi 0, %s13
    %p10 = scmp.ge.s32.totalorder %s9, 4
    %s16 = sphi 0, %s35
    %s17 = sphi 0, %s31
    %s18 = sphi 0, %s27
    %s19 = sphi 0, %s16
    %s20 = sphi 0, %s17
    %s21 = sphi 0, %s18
    %s22 = sphi 0, %s19
    %s23 = sphi 0, %s20
    %s24 = sphi 0, %s21
    %s42 = sphi 0, %s44
    %s45 = sphi 0, %s42
    %s46 = sphi 0, %s45
    %s62 = sphi 0, %s46
    %s68 = sphi 0, %s70
    %s71 = sphi 0, %s68
    %s72 = sphi 0, %s71
    %s88 = sphi 0, %s72
    %s94 = sphi 0, %s96
    %s97 = sphi 0, %s94
    %s98 = sphi 0, %s97
    %s114 = sphi 0, %s98
    %s124 = sphi 0, %s126
    %s127 = sphi 0, %s124
    %s128 = sphi 0, %s127
    %s144 = sphi 0, %s128
  $region4: #{frozen_batch_norm_2d.1} parent=0 // loop_header_branch
    %12 = sbr.rel (%p10) target = $region8
  $region5: #{frozen_batch_norm_2d.1} parent=0 // loop_body
    %s14 = ssub.s32 %s9, 1
    %s15 = ssub.s32 %s9, 2
    %s25 = sadd.s32 1, %s18
    %p26 = scmp.ge.s32.totalorder %s25, 1
    %s27 = scalar_select %p26, 0, %s25
    %s28 = sadd.s32 1, %s17
    %s29 = scalar_select %p26, %s28, %s17
    %p30 = scmp.ge.s32.totalorder %s29, 1
    %s31 = scalar_select %p30, 0, %s29
    %s32 = sadd.s32 1, %s16
    %s33 = scalar_select %p30, %s32, %s16
    %p34 = scmp.ge.s32.totalorder %s33, 2
    %s35 = scalar_select %p34, 0, %s33
    %s36 = ssub.s32 %s16, %s35
    %s37 = ssub.s32 %s17, %s31
    %s38 = sor.u32 %s36, %s37
    %s39 = ssub.s32 %s18, %s27
    %s40 = sor.u32 %s38, %s39
    %p41 = scmp.eq.s32.totalorder %s40, 0
    %s43 = sadd.s32 %s42, 1
    %s44 = scalar_select %p41, %s42, %s43
    %p47 = pneg %p41
    %p48 = scmp.eq.s32.totalorder %s9, 1
    %p49 = por %p47, %p48
    %p50 = scmp.ne.s32.totalorder %s42, %s45
    %p51 = scmp.eq.s32.totalorder %s9, 0
    %p52 = por %p50, %p51
    %p53 = scmp.ne.s32.totalorder %s42, %s45
    %p54 = scmp.eq.s32.totalorder %s14, 1
    %p55 = por %p53, %p54
    %p56 = scmp.ne.s32.totalorder %s45, %s46
    %p57 = scmp.eq.s32.totalorder %s14, 0
    %p58 = por %p56, %p57
    %p59 = scmp.ne.s32.totalorder %s45, %s46
    %p60 = scmp.eq.s32.totalorder %s15, 1
    %p61 = por %p59, %p60
    %p63 = scmp.ne.s32.totalorder %s46, %s62
    %p64 = scmp.eq.s32.totalorder %s15, 0
    %p65 = por %p63, %p64
    %s66 = ssub.s32 %s17, %s31
    %p67 = scmp.eq.s32.totalorder %s66, 0
    %s69 = sadd.s32 %s68, 1
    %s70 = scalar_select %p67, %s68, %s69
    %p73 = pneg %p67
    %p74 = scmp.eq.s32.totalorder %s9, 1
    %p75 = por %p73, %p74
    %p76 = scmp.ne.s32.totalorder %s68, %s71
    %p77 = scmp.eq.s32.totalorder %s9, 0
    %p78 = por %p76, %p77
    %p79 = scmp.ne.s32.totalorder %s68, %s71
    %p80 = scmp.eq.s32.totalorder %s14, 1
    %p81 = por %p79, %p80
    %p82 = scmp.ne.s32.totalorder %s71, %s72
    %p83 = scmp.eq.s32.totalorder %s14, 0
    %p84 = por %p82, %p83
    %p85 = scmp.ne.s32.totalorder %s71, %s72
    %p86 = scmp.eq.s32.totalorder %s15, 1
    %p87 = por %p85, %p86
    %p89 = scmp.ne.s32.totalorder %s72, %s88
    %p90 = scmp.eq.s32.totalorder %s15, 0
    %p91 = por %p89, %p90
    %s92 = ssub.s32 %s17, %s31
    %p93 = scmp.eq.s32.totalorder %s92, 0
    %s95 = sadd.s32 %s94, 1
    %s96 = scalar_select %p93, %s94, %s95
    %p99 = pneg %p93
    %p100 = scmp.eq.s32.totalorder %s9, 1
    %p101 = por %p99, %p100
    %p102 = scmp.ne.s32.totalorder %s94, %s97
    %p103 = scmp.eq.s32.totalorder %s9, 0
    %p104 = por %p102, %p103
    %p105 = scmp.ne.s32.totalorder %s94, %s97
    %p106 = scmp.eq.s32.totalorder %s14, 1
    %p107 = por %p105, %p106
    %p108 = scmp.ne.s32.totalorder %s97, %s98
    %p109 = scmp.eq.s32.totalorder %s14, 0
    %p110 = por %p108, %p109
    %p111 = scmp.ne.s32.totalorder %s97, %s98
    %p112 = scmp.eq.s32.totalorder %s15, 1
    %p113 = por %p111, %p112
    %p115 = scmp.ne.s32.totalorder %s98, %s114
    %p116 = scmp.eq.s32.totalorder %s15, 0
    %p117 = por %p115, %p116
    %s118 = ssub.s32 %s16, %s35
    %s119 = ssub.s32 %s17, %s31
    %s120 = sor.u32 %s118, %s119
    %s121 = ssub.s32 %s18, %s27
    %s122 = sor.u32 %s120, %s121
    %p123 = scmp.eq.s32.totalorder %s122, 0
    %s125 = sadd.s32 %s124, 1
    %s126 = scalar_select %p123, %s124, %s125
    %p129 = pneg %p123
    %p130 = scmp.eq.s32.totalorder %s9, 1
    %p131 = por %p129, %p130
    %p132 = scmp.ne.s32.totalorder %s124, %s127
    %p133 = scmp.eq.s32.totalorder %s9, 0
    %p134 = por %p132, %p133
    %p135 = scmp.ne.s32.totalorder %s124, %s127
    %p136 = scmp.eq.s32.totalorder %s14, 1
    %p137 = por %p135, %p136
    %p138 = scmp.ne.s32.totalorder %s127, %s128
    %p139 = scmp.eq.s32.totalorder %s14, 0
    %p140 = por %p138, %p139
    %p141 = scmp.ne.s32.totalorder %s127, %s128
    %p142 = scmp.eq.s32.totalorder %s15, 1
    %p143 = por %p141, %p142
    %p145 = scmp.ne.s32.totalorder %s128, %s144
    %p146 = scmp.eq.s32.totalorder %s15, 0
    %p147 = por %p145, %p146
    %p148 = scmp.le.s32.totalorder 1, %s9
    %p149 = scmp.lt.s32.totalorder %s9, 3
    %p150 = pnand %p148, %p149
    %p151 = pneg %p150
    // Predicated region
    $region9: #{frozen_batch_norm_2d.1} parent=5 // pred_check
      _
    $region10: #{frozen_batch_norm_2d.1} parent=5 // pred_check_branch
      %153 = sbr.rel (%p150) target = $region12
    $region11: #{frozen_batch_norm_2d.1} parent=5 // pred_region
      %s154 = ssub.s32 %s9, 1
      // Predicated region
      $region13: #{frozen_batch_norm_2d.1} parent=11 // pred_check
        %p155 = pneg %p84
      $region14: #{frozen_batch_norm_2d.1} parent=11 // pred_check_branch
        %157 = sbr.rel (%p155) target = $region16
      $region15: #{frozen_batch_norm_2d.1} parent=11 // pred_region
        %s158 = smul.u32 2, %s20
        %p159 = scmp.lt.s32.totalorder %s158, 1
        %s160 = scalar_select %p159, %s158, 1
        %s161 = smul.addr %s160, 8
        %s162 = scalar_lea.vmem %s1, %s161
        %s163 = smul.u32 2, %s20
      $region16: #{frozen_batch_norm_2d.1} parent=11 // pred_fallthru
        _
      // Predicated region
      $region17: #{frozen_batch_norm_2d.1} parent=11 // pred_check
        %p164 = pneg %p110
      $region18: #{frozen_batch_norm_2d.1} parent=11 // pred_check_branch
        %166 = sbr.rel (%p164) target = $region20
      $region19: #{frozen_batch_norm_2d.1} parent=11 // pred_region
        %s167 = smul.u32 2, %s20
        %p168 = scmp.lt.s32.totalorder %s167, 1
        %s169 = scalar_select %p168, %s167, 1
        %s170 = smul.addr %s169, 8
        %s171 = scalar_lea.vmem %s2, %s170
        %s172 = smul.u32 2, %s20
      $region20: #{frozen_batch_norm_2d.1} parent=11 // pred_fallthru
        _
    $region12: #{frozen_batch_norm_2d.1} parent=5 // pred_fallthru
      _
    %p173 = scmp.lt.s32.totalorder %s9, 2
    // Predicated region
    $region21: #{frozen_batch_norm_2d.1} parent=5 // pred_check
      %p174 = pneg %p173
    $region22: #{frozen_batch_norm_2d.1} parent=5 // pred_check_branch
      %176 = sbr.rel (%p174) target = $region24
    $region23: #{frozen_batch_norm_2d.1} parent=5 // pred_region
      // Predicated region
      $region25: #{frozen_batch_norm_2d.1} parent=23 // pred_check
        %p177 = pneg %p52
      $region26: #{frozen_batch_norm_2d.1} parent=23 // pred_check_branch
        %179 = sbr.rel (%p177) target = $region28
      $region27: #{frozen_batch_norm_2d.1} parent=23 // pred_region
        %s180 = smul.u32 2, %s17
        %s181 = smul.u32 8, %s18
        %p182 = scmp.lt.s32.totalorder %s16, 1
        %s183 = scalar_select %p182, %s16, 1
        %p184 = scmp.lt.s32.totalorder %s180, 1
        %s185 = scalar_select %p184, %s180, 1
        %p186 = scmp.lt.s32.totalorder %s181, 7
        %s187 = scalar_select %p186, %s181, 7
        %s188 = smul.addr %s185, 8
        %s189 = sadd.s32 %s187, %s188
        %s190 = smul.addr %s183, 16
        %s191 = sadd.s32 %s189, %s190
        %s192 = smul.addr %s191, 8
        %s193 = scalar_lea.vmem %s0, %s192
        %s194 = smul.u32 2, %s17
        %s195 = smul.u32 8, %s18
      $region28: #{frozen_batch_norm_2d.1} parent=23 // pred_fallthru
        _
    $region24: #{frozen_batch_norm_2d.1} parent=5 // pred_fallthru
      _
    %p196 = scmp.le.s32.totalorder 1, %s9
    %p197 = scmp.lt.s32.totalorder %s9, 3
    %p198 = pnand %p196, %p197
    %p199 = pneg %p198
    // Predicated region
    $region29: #{frozen_batch_norm_2d.1} parent=5 // pred_check
      _
    $region30: #{frozen_batch_norm_2d.1} parent=5 // pred_check_branch
      %201 = sbr.rel (%p198) target = $region32
    $region31: #{frozen_batch_norm_2d.1} parent=5 // pred_region
      %s202 = ssub.s32 %s9, 1
      %s203 = smul.u32 2, %s20
      %s204 = smul.u32 8, %s21
      %p205 = scmp.lt.s32.totalorder %s19, 1
      %s206 = scalar_select %p205, %s19, 1
      %p207 = scmp.lt.s32.totalorder %s203, 1
      %s208 = scalar_select %p207, %s203, 1
      %p209 = scmp.lt.s32.totalorder %s204, 7
      %s210 = scalar_select %p209, %s204, 7
      %s211 = smul.addr %s208, 8
      %s212 = sadd.s32 %s210, %s211
      %s213 = smul.addr %s206, 16
      %s214 = sadd.s32 %s212, %s213
      %s215 = smul.addr %s214, 8
      %s216 = scalar_lea.vmem %s0, %s215
      %p217 = pneg %p58
      %p218 = pneg %p55
      %s219 = smul.u32 2, %s20
      %p220 = scmp.lt.s32.totalorder %s219, 1
      %s221 = scalar_select %p220, %s219, 1
      %s222 = smul.addr %s221, 8
      %s223 = scalar_lea.vmem %s1, %s222
      %p224 = pneg %p84
      %p225 = pneg %p81
      %s226 = smul.u32 2, %s20
      %p227 = scmp.lt.s32.totalorder %s226, 1
      %s228 = scalar_select %p227, %s226, 1
      %s229 = smul.addr %s228, 8
      %s230 = scalar_lea.vmem %s2, %s229
      %p231 = pneg %p110
      %p232 = pneg %p107
      %p233 = pneg %p140
      %p234 = pneg %p137
      %s235 = smul.u32 2, %s20
      %s236 = smul.u32 8, %s21
      %p237 = scmp.lt.s32.totalorder %s19, 1
      %s238 = scalar_select %p237, %s19, 1
      %p239 = scmp.lt.s32.totalorder %s235, 1
      %s240 = scalar_select %p239, %s235, 1
      %p241 = scmp.lt.s32.totalorder %s236, 7
      %s242 = scalar_select %p241, %s236, 7
      %s243 = smul.addr %s240, 8
      %s244 = sadd.s32 %s242, %s243
      %s245 = smul.addr %s238, 16
      %s246 = sadd.s32 %s244, %s245
      %s247 = smul.addr %s246, 8
      %s248 = scalar_lea.vmem %s3, %s247
      %s249 = smul.u32 2, %s20
      %s250 = smul.u32 8, %s21
      %p251 = scmp.lt.s32.totalorder %s19, 1
      %s252 = scalar_select %p251, %s19, 1
      %p253 = scmp.lt.s32.totalorder %s249, 1
      %s254 = scalar_select %p253, %s249, 1
      %p255 = scmp.lt.s32.totalorder %s250, 7
      %s256 = scalar_select %p255, %s250, 7
      %s257 = smul.addr %s254, 8
      %s258 = sadd.s32 %s256, %s257
      %s259 = smul.addr %s252, 16
      %s260 = sadd.s32 %s258, %s259
      %s261 = smul.addr %s260, 8
      %s262 = scalar_lea.vmem %s0, %s261
      %s263 = smul.u32 2, %s20
      %s264 = smul.u32 8, %s21
      %s265 = smul.u32 2, %s20
      %p266 = scmp.lt.s32.totalorder %s265, 1
      %s267 = scalar_select %p266, %s265, 1
      %s268 = smul.addr %s267, 8
      %s269 = scalar_lea.vmem %s1, %s268
      %s270 = smul.u32 2, %s20
      %s271 = smul.u32 2, %s20
      %p272 = scmp.lt.s32.totalorder %s271, 1
      %s273 = scalar_select %p272, %s271, 1
      %s274 = smul.addr %s273, 8
      %s275 = scalar_lea.vmem %s2, %s274
      %s276 = smul.u32 2, %s20
      %s277 = smul.u32 2, %s20
      %s278 = smul.u32 8, %s21
      %p279 = scmp.lt.s32.totalorder %s19, 1
      %s280 = scalar_select %p279, %s19, 1
      %p281 = scmp.lt.s32.totalorder %s277, 1
      %s282 = scalar_select %p281, %s277, 1
      %p283 = scmp.lt.s32.totalorder %s278, 7
      %s284 = scalar_select %p283, %s278, 7
      %s285 = smul.addr %s282, 8
      %s286 = sadd.s32 %s284, %s285
      %s287 = smul.addr %s280, 16
      %s288 = sadd.s32 %s286, %s287
      %s289 = smul.addr %s288, 8
      %s290 = scalar_lea.vmem %s3, %s289
      %s291 = smul.u32 2, %s20
      %s292 = smul.u32 8, %s21
      %v293 = vld [vmem:[%s262] sm:$0xff]
      %v294 = vld [vmem:[%s262 + $0x8] sm:$0xff]
      %v295 = vld [vmem:[%s262 + $0x10] sm:$0xff]
      %v296 = vld [vmem:[%s262 + $0x18] sm:$0xff]
      %v297 = vld [vmem:[%s262 + $0x20] sm:$0xff]
      %v298 = vld [vmem:[%s262 + $0x28] sm:$0xff]
      %v299 = vld [vmem:[%s262 + $0x30] sm:$0xff]
      %v300 = vld [vmem:[%s262 + $0x38] sm:$0xff]
      %v301 = vld [vmem:[%s262 + $0x40] sm:$0xff]
      %v302 = vld [vmem:[%s262 + $0x48] sm:$0xff]
      %v303 = vld [vmem:[%s262 + $0x50] sm:$0xff]
      %v304 = vld [vmem:[%s262 + $0x58] sm:$0xff]
      %v305 = vld [vmem:[%s262 + $0x60] sm:$0xff]
      %v306 = vld [vmem:[%s262 + $0x68] sm:$0xff]
      %v307 = vld [vmem:[%s262 + $0x70] sm:$0xff]
      %v308 = vld [vmem:[%s262 + $0x78] sm:$0xff]
      %v309 = vld [vmem:[%s269] sm:$0xff]
      %v310 = vld [vmem:[%s269 + $0x8] sm:$0xff]
      %312 = vset.pattern.permute.xlu0 0
      %313 = vperm.xlu0 %312, %v309
      %v314 = vpop.permute.xlu0 %313
      %317 = vset.pattern.permute.xlu0 0
      %318 = vperm.xlu0 %317, %v310
      %v319 = vpop.permute.xlu0 %318
      %v321 = vmul.f32 %v293, %v314
      %v322 = vmul.f32 %v294, %v314
      %v323 = vmul.f32 %v295, %v314
      %v324 = vmul.f32 %v296, %v314
      %v325 = vmul.f32 %v297, %v314
      %v326 = vmul.f32 %v298, %v314
      %v327 = vmul.f32 %v299, %v314
      %v328 = vmul.f32 %v300, %v314
      %v329 = vmul.f32 %v301, %v319
      %v330 = vmul.f32 %v302, %v319
      %v331 = vmul.f32 %v303, %v319
      %v332 = vmul.f32 %v304, %v319
      %v333 = vmul.f32 %v305, %v319
      %v334 = vmul.f32 %v306, %v319
      %v335 = vmul.f32 %v307, %v319
      %v336 = vmul.f32 %v308, %v319
      %v337 = vld [vmem:[%s275] sm:$0xff]
      %v338 = vld [vmem:[%s275 + $0x8] sm:$0xff]
      %340 = vset.pattern.permute.xlu0 0
      %341 = vperm.xlu0 %340, %v337
      %v342 = vpop.permute.xlu0 %341
      %345 = vset.pattern.permute.xlu0 0
      %346 = vperm.xlu0 %345, %v338
      %v347 = vpop.permute.xlu0 %346
      %v349 = vadd.f32 %v321, %v342
      %v350 = vadd.f32 %v322, %v342
      %v351 = vadd.f32 %v323, %v342
      %v352 = vadd.f32 %v324, %v342
      %v353 = vadd.f32 %v325, %v342
      %v354 = vadd.f32 %v326, %v342
      %v355 = vadd.f32 %v327, %v342
      %v356 = vadd.f32 %v328, %v342
      %v357 = vadd.f32 %v329, %v347
      %v358 = vadd.f32 %v330, %v347
      %v359 = vadd.f32 %v331, %v347
      %v360 = vadd.f32 %v332, %v347
      %v361 = vadd.f32 %v333, %v347
      %v362 = vadd.f32 %v334, %v347
      %v363 = vadd.f32 %v335, %v347
      %v364 = vadd.f32 %v336, %v347
      %365 = vst [vmem:[%s290] sm:$0xff] %v349
      %366 = vst [vmem:[%s290 + $0x8] sm:$0xff] %v350
      %367 = vst [vmem:[%s290 + $0x10] sm:$0xff] %v351
      %368 = vst [vmem:[%s290 + $0x18] sm:$0xff] %v352
      %369 = vst [vmem:[%s290 + $0x20] sm:$0xff] %v353
      %370 = vst [vmem:[%s290 + $0x28] sm:$0xff] %v354
      %371 = vst [vmem:[%s290 + $0x30] sm:$0xff] %v355
      %372 = vst [vmem:[%s290 + $0x38] sm:$0xff] %v356
      %373 = vst [vmem:[%s290 + $0x40] sm:$0xff] %v357
      %374 = vst [vmem:[%s290 + $0x48] sm:$0xff] %v358
      %375 = vst [vmem:[%s290 + $0x50] sm:$0xff] %v359
      %376 = vst [vmem:[%s290 + $0x58] sm:$0xff] %v360
      %377 = vst [vmem:[%s290 + $0x60] sm:$0xff] %v361
      %378 = vst [vmem:[%s290 + $0x68] sm:$0xff] %v362
      %379 = vst [vmem:[%s290 + $0x70] sm:$0xff] %v363
      %380 = vst [vmem:[%s290 + $0x78] sm:$0xff] %v364
      %s381 = smul.u32 2, %s20
      %s382 = smul.u32 8, %s21
      %p383 = scmp.lt.s32.totalorder %s19, 1
      %s384 = scalar_select %p383, %s19, 1
      %p385 = scmp.lt.s32.totalorder %s381, 1
      %s386 = scalar_select %p385, %s381, 1
      %p387 = scmp.lt.s32.totalorder %s382, 7
      %s388 = scalar_select %p387, %s382, 7
      %s389 = smul.addr %s386, 8
      %s390 = sadd.s32 %s388, %s389
      %s391 = smul.addr %s384, 16
      %s392 = sadd.s32 %s390, %s391
      %s393 = smul.addr %s392, 8
      %s394 = scalar_lea.vmem %s3, %s393
      // Predicated region
      $region33: #{frozen_batch_norm_2d.1} parent=31 // pred_check
        %p395 = pneg %p137
      $region34: #{frozen_batch_norm_2d.1} parent=31 // pred_check_branch
        %397 = sbr.rel (%p395) target = $region36
      $region35: #{frozen_batch_norm_2d.1} parent=31 // pred_region
        %s398 = smul.u32 2, %s20
        %s399 = smul.u32 8, %s21
      $region36: #{frozen_batch_norm_2d.1} parent=31 // pred_fallthru
        _
    $region32: #{frozen_batch_norm_2d.1} parent=5 // pred_fallthru
      _
    %p400 = scmp.le.s32.totalorder 2, %s9
    // Predicated region
    $region37: #{frozen_batch_norm_2d.1} parent=5 // pred_check
      %p401 = pneg %p400
    $region38: #{frozen_batch_norm_2d.1} parent=5 // pred_check_branch
      %403 = sbr.rel (%p401) target = $region40
    $region39: #{frozen_batch_norm_2d.1} parent=5 // pred_region
      %s404 = ssub.s32 %s9, 2
      // Predicated region
      $region41: #{frozen_batch_norm_2d.1} parent=39 // pred_check
        %p405 = pneg %p143
      $region42: #{frozen_batch_norm_2d.1} parent=39 // pred_check_branch
        %407 = sbr.rel (%p405) target = $region44
      $region43: #{frozen_batch_norm_2d.1} parent=39 // pred_region
        %s408 = smul.u32 2, %s23
        %s409 = smul.u32 8, %s24
        %p410 = scmp.lt.s32.totalorder %s22, 1
        %s411 = scalar_select %p410, %s22, 1
        %p412 = scmp.lt.s32.totalorder %s408, 1
        %s413 = scalar_select %p412, %s408, 1
        %p414 = scmp.lt.s32.totalorder %s409, 7
        %s415 = scalar_select %p414, %s409, 7
        %s416 = smul.addr %s413, 8
        %s417 = sadd.s32 %s415, %s416
        %s418 = smul.addr %s411, 16
        %s419 = sadd.s32 %s417, %s418
        %s420 = smul.addr %s419, 8
        %s421 = scalar_lea.vmem %s3, %s420
      $region44: #{frozen_batch_norm_2d.1} parent=39 // pred_fallthru
        _
    $region40: #{frozen_batch_norm_2d.1} parent=5 // pred_fallthru
      _
  $region6: #{frozen_batch_norm_2d.1} parent=0 // loop_footer
    %s13 = sadd.s32 1, %s9
  $region7: #{frozen_batch_norm_2d.1} parent=0 // loop_footer_branch
    %8 = sbr.rel target = $region3
  $region8: #{frozen_batch_norm_2d.1} parent=0 // loop_exit
    _

</llo_original>
